<compile_context>
chip_gen: v6e
topology: v6e:2x2x1
jax: 0.10.0
libtpu: 0.0.40
codegen_flags: <defaults>
</compile_context>

<pallas_src>
import jax
import jax.numpy as jnp
from jax import lax
from jax.experimental import pallas as pl
from jax.experimental.pallas import tpu as pltpu

EPS = 1e-5                 # nn.BatchNorm1d default eps
NEG_SLOPE = 0.2            # GATv2Conv default negative_slope
GLOBAL_FEATURE_SIZE = 8    # stand-in for Graph.global_feature_size
NODE_TYPES = ("operation", "machine", "AGV")


def _batchnorm_train(x, gamma, beta):
    """BatchNorm1d with batch statistics, single pass, folded scale/shift."""
    inv_n = 1.0 / x.shape[0]
    s1 = jnp.sum(x, axis=0, keepdims=True)
    s2 = jnp.sum(x * x, axis=0, keepdims=True)
    mean = s1 * inv_n
    var = jnp.maximum(s2 * inv_n - mean * mean, 0.0)   # guard cancellation
    scale = gamma * lax.rsqrt(var + EPS)
    return x * scale + (beta - mean * scale)


# ----------------------------------------------------------------------------
# Fused kernel: block-diagonal GATv2 aggregation + per-type BN -> graph_mix MLP
# ----------------------------------------------------------------------------
def _make_kernel(n_splits, c_splits, g_dim):
    n_op, n_ma, _ = n_splits
    c_op, c_ma, c_agv = c_splits
    C = c_op + c_ma + c_agv

    def kernel(x_ref, batch_ref, gattr_ref, wl_ref, bvec_ref,
               wmlp_ref, mvec_ref, out_ref):
        N = x_ref.shape[0]
        B = gattr_ref.shape[0]
        F0 = gattr_ref.shape[1]
        H = wmlp_ref.shape[1]
        fin = F0 + C

        # static row/column type-block masks (built from iota, zero DMA cost)
        row_i = lax.broadcasted_iota(jnp.int32, (N, 1), 0)
        row_blk = ((row_i >= n_op).astype(jnp.int32)
                   + (row_i >= n_op + n_ma).astype(jnp.int32))
        col_i = lax.broadcasted_iota(jnp.int32, (1, C), 1)
        col_blk = ((col_i >= c_op).astype(jnp.int32)
                   + (col_i >= c_op + c_ma).astype(jnp.int32))
        blk_f = (row_blk == col_blk).astype(jnp.float32)        # [N, C]

        # bvec rows: 0=b_l, 1=x_r (precomputed tok@W_r+b_r), 2=att, 3=bias,
        #            4=bn_gamma, 5=bn_beta   (all packed per type along lanes)
        b_l = bvec_ref[0:1, :]
        x_r = bvec_ref[1:2, :]
        att = bvec_ref[2:3, :]
        bias = bvec_ref[3:4, :]
        gam = bvec_ref[4:5, :]
        bet = bvec_ref[5:6, :]

        # all three GATv2 branches as one block-diagonal matmul
        xw = jnp.dot(x_ref[...], wl_ref[...],
                     preferred_element_type=jnp.float32)        # [N, C]
        x_l = xw + blk_f * b_l                  # masked b_l: cross-type lanes 0
        z = xw + blk_f * (b_l + x_r)            # masked x_r: cross-type lanes 0
        z = jnp.maximum(z, NEG_SLOPE * z)       # leaky-relu, one VPU op
        e = jnp.sum(z * att, axis=1, keepdims=True)             # [N, 1] logits

        # per-(graph, type) masked softmax; nodes on sublanes, graphs on lanes
        gid = lax.broadcasted_iota(jnp.int32, (N, B), 1)
        gmask = batch_ref[...] == gid                           # [N, B]
        e_b = jnp.where(gmask, e, -jnp.inf)
        # per-graph max is a valid constant shift within each (graph, type)
        # softmax group; clamp guards graphs with no nodes.
        e_max = jnp.maximum(jnp.max(e_b, axis=0, keepdims=True), -1e30)
        p = jnp.where(gmask, jnp.exp(e_b - e_max), 0.0)         # [N, B]

        # aggregation + per-(graph,type) normalizer: trans-LHS MXU matmuls.
        # Columns of other types receive zero from x_l / blk_f, so the packed
        # result is exactly concat(op_global, machine_global, AGV_global).
        dn = (((0,), (0,)), ((), ()))
        unnorm = lax.dot_general(p, x_l, dn,
                                 preferred_element_type=jnp.float32)   # [B, C]
        denom = lax.dot_general(p, blk_f, dn,
                                preferred_element_type=jnp.float32)    # [B, C]
        agg = unnorm * pl.reciprocal(jnp.maximum(denom, 1e-20),
                                     approx=True) + bias
        g_bn = _batchnorm_train(agg, gam, bet)      # columnwise == per-type BN

        # graph_mix MLP: concat([gattr, g_bn]) @ W1 as two row-block matmuls
        h = (jnp.dot(gattr_ref[...], wmlp_ref[0:F0, :],
                     preferred_element_type=jnp.float32)
             + jnp.dot(g_bn, wmlp_ref[F0:fin, :],
                       preferred_element_type=jnp.float32)
             + mvec_ref[0:1, :])
        h = jnp.tanh(_batchnorm_train(h, mvec_ref[1:2, :], mvec_ref[2:3, :]))
        h = jnp.dot(h, wmlp_ref[fin:fin + H, :],
                    preferred_element_type=jnp.float32) + mvec_ref[3:4, :]
        h = jnp.tanh(_batchnorm_train(h, mvec_ref[4:5, :], mvec_ref[5:6, :]))
        gf = (jnp.dot(h, wmlp_ref[fin + H:fin + 2 * H, 0:g_dim],
                      preferred_element_type=jnp.float32)
              + mvec_ref[6:7, 0:g_dim])
        gf = _batchnorm_train(gf, mvec_ref[7:8, 0:g_dim], mvec_ref[8:9, 0:g_dim])

        # single lane-dense packed output store
        pad = out_ref.shape[1] - (C + g_dim)
        parts = [g_bn, gf]
        if pad > 0:
            parts.append(jnp.zeros((B, pad), jnp.float32))
        out_ref[...] = jnp.concatenate(parts, axis=1)

    return kernel


def _vmem_spec():
    return pl.BlockSpec(memory_space=pltpu.MemorySpace.VMEM)


# ----------------------------------------------------------------------------
# Parameter packing (one-time, outside the hot path)
# ----------------------------------------------------------------------------
def prepare_params(params, node_channels, global_channels):
    """Hoist x_r = tok@W_r+b_r, build block-diagonal W_l, pack vectors."""
    cins = tuple(node_channels)
    cs = tuple(global_channels)
    CIN, C = sum(cins), sum(cs)

    wl = jnp.zeros((CIN, C), jnp.float32)
    rows = {k: [] for k in ("b_l", "x_r", "att", "bias", "gamma", "beta")}
    r = c = 0
    for idx, name in enumerate(NODE_TYPES):
        p = params[name]
        wl = wl.at[r:r + cins[idx], c:c + cs[idx]].set(
            p["W_l"].astype(jnp.float32))
        x_r = p["tok"].reshape(1, -1) @ p["W_r"] + p["b_r"].reshape(1, -1)
        rows["b_l"].append(p["b_l"])
        rows["x_r"].append(x_r[0])
        rows["att"].append(p["att"])
        rows["bias"].append(p["bias"])
        rows["gamma"].append(p["gamma"])
        rows["beta"].append(p["beta"])
        r += cins[idx]
        c += cs[idx]
    bvec = jnp.stack(
        [jnp.concatenate(rows[k]) for k in
         ("b_l", "x_r", "att", "bias", "gamma", "beta")], 0
    ).astype(jnp.float32)                                        # [6, C]

    gm = params["graph_mix"]
    fin, H = gm["W1"].shape
    G = gm["W3"].shape[1]
    wmlp = jnp.zeros((fin + 2 * H, H), jnp.float32)
    wmlp = wmlp.at[0:fin, :].set(gm["W1"].astype(jnp.float32))
    wmlp = wmlp.at[fin:fin + H, :].set(gm["W2"].astype(jnp.float32))
    wmlp = wmlp.at[fin + H:fin + 2 * H, 0:G].set(gm["W3"].astype(jnp.float32))

    def _pad(v):
        return jnp.pad(v, (0, H - v.shape[0]))

    mvec = jnp.stack([gm["b1"], gm["g1"], gm["be1"],
                      gm["b2"], gm["g2"], gm["be2"],
                      _pad(gm["b3"]), _pad(gm["g3"]), _pad(gm["be3"])],
                     0).astype(jnp.float32)                      # [9, H]

    return {"W_l": wl, "bvec": bvec, "W_mlp": wmlp, "mvec": mvec,
            "node_channels": cins, "global_channels": cs,
            "graph_dim": int(G), "hidden": int(H)}


# ----------------------------------------------------------------------------
# Python wrapper: one fused pallas_call with 7 input refs
# ----------------------------------------------------------------------------
def state_mixer_forward(x_dict, global_attr, batch_dict, packed, num_graphs):
    cins = packed["node_channels"]
    cs = packed["global_channels"]
    CIN, C = sum(cins), sum(cs)
    G = packed["graph_dim"]

    ns = tuple(int(x_dict[n].shape[0]) for n in NODE_TYPES)
    N = sum(ns)

    # pack node features into one [N, CIN] slab (rows per type, columns in the
    # type's input-channel block) and concat the batch vectors to [N, 1].
    x_packed = jnp.zeros((N, CIN), jnp.float32)
    r = c = 0
    for idx, name in enumerate(NODE_TYPES):
        x_packed = x_packed.at[r:r + ns[idx], c:c + cins[idx]].set(
            x_dict[name].astype(jnp.float32))
        r += ns[idx]
        c += cins[idx]
    batch_packed = jnp.concatenate(
        [batch_dict[n].astype(jnp.int32) for n in NODE_TYPES]).reshape(N, 1)

    used = C + G
    out_pad = ((used + 127) // 128) * 128      # lane-dense output slab width

    kernel = _make_kernel(ns, cs, G)
    out = pl.pallas_call(
        kernel,
        out_shape=jax.ShapeDtypeStruct((num_graphs, out_pad), jnp.float32),
        in_specs=[_vmem_spec()] * 7,
        out_specs=_vmem_spec(),
    )(x_packed, batch_packed, global_attr.astype(jnp.float32),
      packed["W_l"], packed["bvec"], packed["W_mlp"], packed["mvec"])

    o1, o2, o3 = cs[0], cs[0] + cs[1], C
    global_dict = {
        "operation_global": out[:, :o1],
        "machine_global": out[:, o1:o2],
        "AGV_global": out[:, o2:o3],
    }
    graph_feature = out[:, o3:o3 + G]
    return global_dict, graph_feature


# ----------------------------------------------------------------------------
# Deterministic parameter construction (matches __init__ shapes)
# ----------------------------------------------------------------------------
def init_params(key, node_channels, global_channels, graph_global_channels):
    params = {}
    for idx, name in enumerate(NODE_TYPES):
        cin, c = node_channels[idx], global_channels[idx]
        key, k1, k2, k3 = jax.random.split(key, 4)
        params[name] = {
            "tok": jnp.zeros((c,), jnp.float32),           # nn.Parameter(zeros)
            "W_l": 0.1 * jax.random.normal(k1, (cin, c), jnp.float32),
            "b_l": jnp.zeros((c,), jnp.float32),
            "W_r": 0.1 * jax.random.normal(k2, (c, c), jnp.float32),
            "b_r": jnp.zeros((c,), jnp.float32),
            "att": 0.1 * jax.random.normal(k3, (c,), jnp.float32),
            "bias": jnp.zeros((c,), jnp.float32),
            "gamma": jnp.ones((c,), jnp.float32),          # BatchNorm1d init
            "beta": jnp.zeros((c,), jnp.float32),
        }
    f_in = sum(global_channels) + GLOBAL_FEATURE_SIZE
    h = graph_global_channels * 2
    g = graph_global_channels
    key, k1, k2, k3 = jax.random.split(key, 4)
    params["graph_mix"] = {
        "W1": 0.1 * jax.random.normal(k1, (f_in, h), jnp.float32),
        "b1": jnp.zeros((h,), jnp.float32),
        "g1": jnp.ones((h,), jnp.float32), "be1": jnp.zeros((h,), jnp.float32),
        "W2": 0.1 * jax.random.normal(k2, (h, h), jnp.float32),
        "b2": jnp.zeros((h,), jnp.float32),
        "g2": jnp.ones((h,), jnp.float32), "be2": jnp.zeros((h,), jnp.float32),
        "W3": 0.1 * jax.random.normal(k3, (h, g), jnp.float32),
        "b3": jnp.zeros((g,), jnp.float32),
        "g3": jnp.ones((g,), jnp.float32), "be3": jnp.zeros((g,), jnp.float32),
    }
    return params


if __name__ == "__main__":
    node_channels = (16, 12, 8)
    global_channels = (32, 24, 16)
    graph_global_channels = 32
    num_graphs = 4

    key = jax.random.PRNGKey(0)
    key, kp, ko, km, ka, kg = jax.random.split(key, 6)
    params = init_params(kp, node_channels, global_channels,
                         graph_global_channels)
    packed_params = prepare_params(params, node_channels, global_channels)

    # synthetic node sets: 20 operations, 12 machines, 8 AGVs over 4 graphs
    x_dict = {
        "operation": jax.random.normal(ko, (20, node_channels[0]), jnp.float32),
        "machine":   jax.random.normal(km, (12, node_channels[1]), jnp.float32),
        "AGV":       jax.random.normal(ka, (8,  node_channels[2]), jnp.float32),
    }
    batch_dict = {
        "operation": jnp.repeat(jnp.arange(num_graphs, dtype=jnp.int32), 5),
        "machine":   jnp.repeat(jnp.arange(num_graphs, dtype=jnp.int32), 3),
        "AGV":       jnp.repeat(jnp.arange(num_graphs, dtype=jnp.int32), 2),
    }
    global_attr = jax.random.normal(kg, (num_graphs, GLOBAL_FEATURE_SIZE),
                                    jnp.float32)

    global_dict, graph_feature = state_mixer_forward(
        x_dict, global_attr, batch_dict, packed_params, num_graphs)

    jax.block_until_ready(graph_feature)
    for v in global_dict.values():
        jax.block_until_ready(v)

    assert graph_feature.shape == (num_graphs, graph_global_channels)
    assert global_dict["operation_global"].shape == (num_graphs, global_channels[0])
    assert global_dict["machine_global"].shape == (num_graphs, global_channels[1])
    assert global_dict["AGV_global"].shape == (num_graphs, global_channels[2])
    assert bool(jnp.all(jnp.isfinite(graph_feature)))
    for v in global_dict.values():
        assert bool(jnp.all(jnp.isfinite(v)))
    print("KERNEL_OK")
</pallas_src>

<mosaic_0001>
module attributes {stable_mosaic.version = 11 : i64} {
  func.func @kernel(%arg0: memref<40x36xf32, #tpu.memory_space<vmem>>, %arg1: memref<40x1xi32, #tpu.memory_space<vmem>>, %arg2: memref<4x8xf32, #tpu.memory_space<vmem>>, %arg3: memref<36x72xf32, #tpu.memory_space<vmem>>, %arg4: memref<6x72xf32, #tpu.memory_space<vmem>>, %arg5: memref<208x64xf32, #tpu.memory_space<vmem>>, %arg6: memref<9x64xf32, #tpu.memory_space<vmem>>, %arg7: memref<4x128xf32, #tpu.memory_space<vmem>>) attributes {dimension_semantics = [], scalar_prefetch = 0 : i64, scratch_operands = 0 : i64, tpu.core_type = #tpu.core_type<tc>} {
    %0 = tpu.iota {dimensions = array<i32: 0>} : vector<40x1xi32>
    %c20_i32 = arith.constant 20 : i32
    %1 = vector.broadcast %c20_i32 : i32 to vector<40x1xi32>
    %2 = arith.cmpi sge, %0, %1 : vector<40x1xi32>
    %3 = arith.extui %2 : vector<40x1xi1> to vector<40x1xi32>
    %c32_i32 = arith.constant 32 : i32
    %4 = vector.broadcast %c32_i32 : i32 to vector<40x1xi32>
    %5 = arith.cmpi sge, %0, %4 : vector<40x1xi32>
    %6 = arith.extui %5 : vector<40x1xi1> to vector<40x1xi32>
    %7 = arith.addi %3, %6 : vector<40x1xi32>
    %8 = tpu.iota {dimensions = array<i32: 1>} : vector<1x72xi32>
    %c32_i32_0 = arith.constant 32 : i32
    %9 = vector.broadcast %c32_i32_0 : i32 to vector<1x72xi32>
    %10 = arith.cmpi sge, %8, %9 : vector<1x72xi32>
    %11 = arith.extui %10 : vector<1x72xi1> to vector<1x72xi32>
    %c56_i32 = arith.constant 56 : i32
    %12 = vector.broadcast %c56_i32 : i32 to vector<1x72xi32>
    %13 = arith.cmpi sge, %8, %12 : vector<1x72xi32>
    %14 = arith.extui %13 : vector<1x72xi1> to vector<1x72xi32>
    %15 = arith.addi %11, %14 : vector<1x72xi32>
    %16 = vector.broadcast %7 : vector<40x1xi32> to vector<40x72xi32>
    %17 = vector.broadcast %15 : vector<1x72xi32> to vector<40x72xi32>
    %18 = arith.cmpi eq, %16, %17 : vector<40x72xi32>
    %19 = arith.extui %18 : vector<40x72xi1> to vector<40x72xi32>
    %20 = arith.sitofp %19 : vector<40x72xi32> to vector<40x72xf32>
    %c0 = arith.constant 0 : index
    %c0_1 = arith.constant 0 : index
    %21 = vector.load %arg4[%c0, %c0_1] : memref<6x72xf32, #tpu.memory_space<vmem>>, vector<1x72xf32>
    %c1 = arith.constant 1 : index
    %c0_2 = arith.constant 0 : index
    %22 = vector.load %arg4[%c1, %c0_2] : memref<6x72xf32, #tpu.memory_space<vmem>>, vector<1x72xf32>
    %c2 = arith.constant 2 : index
    %c0_3 = arith.constant 0 : index
    %23 = vector.load %arg4[%c2, %c0_3] : memref<6x72xf32, #tpu.memory_space<vmem>>, vector<1x72xf32>
    %c3 = arith.constant 3 : index
    %c0_4 = arith.constant 0 : index
    %24 = vector.load %arg4[%c3, %c0_4] : memref<6x72xf32, #tpu.memory_space<vmem>>, vector<1x72xf32>
    %c4 = arith.constant 4 : index
    %c0_5 = arith.constant 0 : index
    %25 = vector.load %arg4[%c4, %c0_5] : memref<6x72xf32, #tpu.memory_space<vmem>>, vector<1x72xf32>
    %c5 = arith.constant 5 : index
    %c0_6 = arith.constant 0 : index
    %26 = vector.load %arg4[%c5, %c0_6] : memref<6x72xf32, #tpu.memory_space<vmem>>, vector<1x72xf32>
    %c0_7 = arith.constant 0 : index
    %c0_8 = arith.constant 0 : index
    %27 = vector.load %arg0[%c0_7, %c0_8] : memref<40x36xf32, #tpu.memory_space<vmem>>, vector<40x36xf32>
    %c0_9 = arith.constant 0 : index
    %c0_10 = arith.constant 0 : index
    %28 = vector.load %arg3[%c0_9, %c0_10] : memref<36x72xf32, #tpu.memory_space<vmem>>, vector<36x72xf32>
    %cst = arith.constant dense<0.000000e+00> : vector<40x72xf32>
    %29 = tpu.matmul %27, %28, %cst {dimension_numbers = #tpu.dot_dimension_numbers<[1], [0], [0], [1], [0, 0, 1, 1], [], []>} : vector<40x36xf32>, vector<36x72xf32>, vector<40x72xf32> -> vector<40x72xf32>
    %30 = vector.broadcast %21 : vector<1x72xf32> to vector<40x72xf32>
    %31 = arith.mulf %20, %30 : vector<40x72xf32>
    %32 = arith.addf %29, %31 : vector<40x72xf32>
    %33 = arith.addf %21, %22 : vector<1x72xf32>
    %34 = vector.broadcast %33 : vector<1x72xf32> to vector<40x72xf32>
    %35 = arith.mulf %20, %34 : vector<40x72xf32>
    %36 = arith.addf %29, %35 : vector<40x72xf32>
    %cst_11 = arith.constant 2.000000e-01 : f32
    %37 = vector.broadcast %cst_11 : f32 to vector<40x72xf32>
    %38 = arith.mulf %37, %36 : vector<40x72xf32>
    %39 = arith.maximumf %36, %38 : vector<40x72xf32>
    %40 = vector.broadcast %23 : vector<1x72xf32> to vector<40x72xf32>
    %41 = arith.mulf %39, %40 : vector<40x72xf32>
    %cst_12 = arith.constant dense<0.000000e+00> : vector<40xf32>
    %42 = vector.multi_reduction <add>, %41, %cst_12 [1] : vector<40x72xf32> to vector<40xf32>
    %43 = vector.shape_cast %42 : vector<40xf32> to vector<40x1xf32>
    %44 = tpu.iota {dimensions = array<i32: 1>} : vector<40x4xi32>
    %c0_13 = arith.constant 0 : index
    %c0_14 = arith.constant 0 : index
    %45 = vector.load %arg1[%c0_13, %c0_14] : memref<40x1xi32, #tpu.memory_space<vmem>>, vector<40x1xi32>
    %46 = vector.broadcast %45 : vector<40x1xi32> to vector<40x4xi32>
    %47 = arith.cmpi eq, %46, %44 : vector<40x4xi32>
    %cst_15 = arith.constant 0xFF800000 : f32
    %48 = vector.shape_cast %43 : vector<40x1xf32> to vector<40x1xf32>
    %49 = vector.broadcast %48 : vector<40x1xf32> to vector<40x4xf32>
    %50 = vector.broadcast %cst_15 : f32 to vector<40x4xf32>
    %51 = arith.select %47, %49, %50 : vector<40x4xi1>, vector<40x4xf32>
    %cst_16 = arith.constant dense<0xFF800000> : vector<4xf32>
    %52 = vector.multi_reduction <maximumf>, %51, %cst_16 [0] : vector<40x4xf32> to vector<4xf32>
    %53 = vector.shape_cast %52 : vector<4xf32> to vector<1x4xf32>
    %cst_17 = arith.constant -1.000000e+30 : f32
    %54 = vector.broadcast %cst_17 : f32 to vector<1x4xf32>
    %55 = arith.maximumf %53, %54 : vector<1x4xf32>
    %56 = vector.broadcast %55 : vector<1x4xf32> to vector<40x4xf32>
    %57 = arith.subf %51, %56 : vector<40x4xf32>
    %58 = math.exp %57 : vector<40x4xf32>
    %cst_18 = arith.constant 0.000000e+00 : f32
    %59 = vector.broadcast %cst_18 : f32 to vector<40x4xf32>
    %60 = arith.select %47, %58, %59 : vector<40x4xi1>, vector<40x4xf32>
    %cst_19 = arith.constant dense<0.000000e+00> : vector<4x72xf32>
    %61 = tpu.matmul %60, %32, %cst_19 {dimension_numbers = #tpu.dot_dimension_numbers<[0], [0], [1], [1], [0, 1, 1, 1], [], []>} : vector<40x4xf32>, vector<40x72xf32>, vector<4x72xf32> -> vector<4x72xf32>
    %cst_20 = arith.constant dense<0.000000e+00> : vector<4x72xf32>
    %62 = tpu.matmul %60, %20, %cst_20 {dimension_numbers = #tpu.dot_dimension_numbers<[0], [0], [1], [1], [0, 1, 1, 1], [], []>} : vector<40x4xf32>, vector<40x72xf32>, vector<4x72xf32> -> vector<4x72xf32>
    %cst_21 = arith.constant 9.99999968E-21 : f32
    %63 = vector.broadcast %cst_21 : f32 to vector<4x72xf32>
    %64 = arith.maximumf %62, %63 : vector<4x72xf32>
    %65 = tpu.reciprocal %64 {approx = true} : vector<4x72xf32> -> vector<4x72xf32>
    %66 = arith.mulf %61, %65 : vector<4x72xf32>
    %67 = vector.broadcast %24 : vector<1x72xf32> to vector<4x72xf32>
    %68 = arith.addf %66, %67 : vector<4x72xf32>
    %cst_22 = arith.constant dense<0.000000e+00> : vector<72xf32>
    %69 = vector.multi_reduction <add>, %68, %cst_22 [0] : vector<4x72xf32> to vector<72xf32>
    %70 = vector.shape_cast %69 : vector<72xf32> to vector<1x72xf32>
    %71 = arith.mulf %68, %68 : vector<4x72xf32>
    %cst_23 = arith.constant dense<0.000000e+00> : vector<72xf32>
    %72 = vector.multi_reduction <add>, %71, %cst_23 [0] : vector<4x72xf32> to vector<72xf32>
    %73 = vector.shape_cast %72 : vector<72xf32> to vector<1x72xf32>
    %cst_24 = arith.constant 2.500000e-01 : f32
    %74 = vector.broadcast %cst_24 : f32 to vector<1x72xf32>
    %75 = arith.mulf %70, %74 : vector<1x72xf32>
    %cst_25 = arith.constant 2.500000e-01 : f32
    %76 = vector.broadcast %cst_25 : f32 to vector<1x72xf32>
    %77 = arith.mulf %73, %76 : vector<1x72xf32>
    %78 = arith.mulf %75, %75 : vector<1x72xf32>
    %79 = arith.subf %77, %78 : vector<1x72xf32>
    %cst_26 = arith.constant 0.000000e+00 : f32
    %80 = vector.broadcast %cst_26 : f32 to vector<1x72xf32>
    %81 = arith.maximumf %79, %80 : vector<1x72xf32>
    %cst_27 = arith.constant 9.99999974E-6 : f32
    %82 = vector.broadcast %cst_27 : f32 to vector<1x72xf32>
    %83 = arith.addf %81, %82 : vector<1x72xf32>
    %84 = math.rsqrt %83 : vector<1x72xf32>
    %85 = arith.mulf %25, %84 : vector<1x72xf32>
    %86 = vector.broadcast %85 : vector<1x72xf32> to vector<4x72xf32>
    %87 = arith.mulf %68, %86 : vector<4x72xf32>
    %88 = arith.mulf %75, %85 : vector<1x72xf32>
    %89 = arith.subf %26, %88 : vector<1x72xf32>
    %90 = vector.broadcast %89 : vector<1x72xf32> to vector<4x72xf32>
    %91 = arith.addf %87, %90 : vector<4x72xf32>
    %c0_28 = arith.constant 0 : index
    %c0_29 = arith.constant 0 : index
    %92 = vector.load %arg2[%c0_28, %c0_29] : memref<4x8xf32, #tpu.memory_space<vmem>>, vector<4x8xf32>
    %c0_30 = arith.constant 0 : index
    %c0_31 = arith.constant 0 : index
    %93 = vector.load %arg5[%c0_30, %c0_31] : memref<208x64xf32, #tpu.memory_space<vmem>>, vector<8x64xf32>
    %cst_32 = arith.constant dense<0.000000e+00> : vector<4x64xf32>
    %94 = tpu.matmul %92, %93, %cst_32 {dimension_numbers = #tpu.dot_dimension_numbers<[1], [0], [0], [1], [0, 0, 1, 1], [], []>} : vector<4x8xf32>, vector<8x64xf32>, vector<4x64xf32> -> vector<4x64xf32>
    %c8 = arith.constant 8 : index
    %c0_33 = arith.constant 0 : index
    %95 = vector.load %arg5[%c8, %c0_33] : memref<208x64xf32, #tpu.memory_space<vmem>>, vector<72x64xf32>
    %cst_34 = arith.constant dense<0.000000e+00> : vector<4x64xf32>
    %96 = tpu.matmul %91, %95, %cst_34 {dimension_numbers = #tpu.dot_dimension_numbers<[1], [0], [0], [1], [0, 0, 1, 1], [], []>} : vector<4x72xf32>, vector<72x64xf32>, vector<4x64xf32> -> vector<4x64xf32>
    %97 = arith.addf %94, %96 : vector<4x64xf32>
    %c0_35 = arith.constant 0 : index
    %c0_36 = arith.constant 0 : index
    %98 = vector.load %arg6[%c0_35, %c0_36] : memref<9x64xf32, #tpu.memory_space<vmem>>, vector<1x64xf32>
    %99 = vector.broadcast %98 : vector<1x64xf32> to vector<4x64xf32>
    %100 = arith.addf %97, %99 : vector<4x64xf32>
    %c1_37 = arith.constant 1 : index
    %c0_38 = arith.constant 0 : index
    %101 = vector.load %arg6[%c1_37, %c0_38] : memref<9x64xf32, #tpu.memory_space<vmem>>, vector<1x64xf32>
    %c2_39 = arith.constant 2 : index
    %c0_40 = arith.constant 0 : index
    %102 = vector.load %arg6[%c2_39, %c0_40] : memref<9x64xf32, #tpu.memory_space<vmem>>, vector<1x64xf32>
    %cst_41 = arith.constant dense<0.000000e+00> : vector<64xf32>
    %103 = vector.multi_reduction <add>, %100, %cst_41 [0] : vector<4x64xf32> to vector<64xf32>
    %104 = vector.shape_cast %103 : vector<64xf32> to vector<1x64xf32>
    %105 = arith.mulf %100, %100 : vector<4x64xf32>
    %cst_42 = arith.constant dense<0.000000e+00> : vector<64xf32>
    %106 = vector.multi_reduction <add>, %105, %cst_42 [0] : vector<4x64xf32> to vector<64xf32>
    %107 = vector.shape_cast %106 : vector<64xf32> to vector<1x64xf32>
    %cst_43 = arith.constant 2.500000e-01 : f32
    %108 = vector.broadcast %cst_43 : f32 to vector<1x64xf32>
    %109 = arith.mulf %104, %108 : vector<1x64xf32>
    %cst_44 = arith.constant 2.500000e-01 : f32
    %110 = vector.broadcast %cst_44 : f32 to vector<1x64xf32>
    %111 = arith.mulf %107, %110 : vector<1x64xf32>
    %112 = arith.mulf %109, %109 : vector<1x64xf32>
    %113 = arith.subf %111, %112 : vector<1x64xf32>
    %cst_45 = arith.constant 0.000000e+00 : f32
    %114 = vector.broadcast %cst_45 : f32 to vector<1x64xf32>
    %115 = arith.maximumf %113, %114 : vector<1x64xf32>
    %cst_46 = arith.constant 9.99999974E-6 : f32
    %116 = vector.broadcast %cst_46 : f32 to vector<1x64xf32>
    %117 = arith.addf %115, %116 : vector<1x64xf32>
    %118 = math.rsqrt %117 : vector<1x64xf32>
    %119 = arith.mulf %101, %118 : vector<1x64xf32>
    %120 = vector.broadcast %119 : vector<1x64xf32> to vector<4x64xf32>
    %121 = arith.mulf %100, %120 : vector<4x64xf32>
    %122 = arith.mulf %109, %119 : vector<1x64xf32>
    %123 = arith.subf %102, %122 : vector<1x64xf32>
    %124 = vector.broadcast %123 : vector<1x64xf32> to vector<4x64xf32>
    %125 = arith.addf %121, %124 : vector<4x64xf32>
    %126 = math.tanh %125 : vector<4x64xf32>
    %c80 = arith.constant 80 : index
    %c0_47 = arith.constant 0 : index
    %127 = vector.load %arg5[%c80, %c0_47] : memref<208x64xf32, #tpu.memory_space<vmem>>, vector<64x64xf32>
    %cst_48 = arith.constant dense<0.000000e+00> : vector<4x64xf32>
    %128 = tpu.matmul %126, %127, %cst_48 {dimension_numbers = #tpu.dot_dimension_numbers<[1], [0], [0], [1], [0, 0, 1, 1], [], []>} : vector<4x64xf32>, vector<64x64xf32>, vector<4x64xf32> -> vector<4x64xf32>
    %c3_49 = arith.constant 3 : index
    %c0_50 = arith.constant 0 : index
    %129 = vector.load %arg6[%c3_49, %c0_50] : memref<9x64xf32, #tpu.memory_space<vmem>>, vector<1x64xf32>
    %130 = vector.broadcast %129 : vector<1x64xf32> to vector<4x64xf32>
    %131 = arith.addf %128, %130 : vector<4x64xf32>
    %c4_51 = arith.constant 4 : index
    %c0_52 = arith.constant 0 : index
    %132 = vector.load %arg6[%c4_51, %c0_52] : memref<9x64xf32, #tpu.memory_space<vmem>>, vector<1x64xf32>
    %c5_53 = arith.constant 5 : index
    %c0_54 = arith.constant 0 : index
    %133 = vector.load %arg6[%c5_53, %c0_54] : memref<9x64xf32, #tpu.memory_space<vmem>>, vector<1x64xf32>
    %cst_55 = arith.constant dense<0.000000e+00> : vector<64xf32>
    %134 = vector.multi_reduction <add>, %131, %cst_55 [0] : vector<4x64xf32> to vector<64xf32>
    %135 = vector.shape_cast %134 : vector<64xf32> to vector<1x64xf32>
    %136 = arith.mulf %131, %131 : vector<4x64xf32>
    %cst_56 = arith.constant dense<0.000000e+00> : vector<64xf32>
    %137 = vector.multi_reduction <add>, %136, %cst_56 [0] : vector<4x64xf32> to vector<64xf32>
    %138 = vector.shape_cast %137 : vector<64xf32> to vector<1x64xf32>
    %cst_57 = arith.constant 2.500000e-01 : f32
    %139 = vector.broadcast %cst_57 : f32 to vector<1x64xf32>
    %140 = arith.mulf %135, %139 : vector<1x64xf32>
    %cst_58 = arith.constant 2.500000e-01 : f32
    %141 = vector.broadcast %cst_58 : f32 to vector<1x64xf32>
    %142 = arith.mulf %138, %141 : vector<1x64xf32>
    %143 = arith.mulf %140, %140 : vector<1x64xf32>
    %144 = arith.subf %142, %143 : vector<1x64xf32>
    %cst_59 = arith.constant 0.000000e+00 : f32
    %145 = vector.broadcast %cst_59 : f32 to vector<1x64xf32>
    %146 = arith.maximumf %144, %145 : vector<1x64xf32>
    %cst_60 = arith.constant 9.99999974E-6 : f32
    %147 = vector.broadcast %cst_60 : f32 to vector<1x64xf32>
    %148 = arith.addf %146, %147 : vector<1x64xf32>
    %149 = math.rsqrt %148 : vector<1x64xf32>
    %150 = arith.mulf %132, %149 : vector<1x64xf32>
    %151 = vector.broadcast %150 : vector<1x64xf32> to vector<4x64xf32>
    %152 = arith.mulf %131, %151 : vector<4x64xf32>
    %153 = arith.mulf %140, %150 : vector<1x64xf32>
    %154 = arith.subf %133, %153 : vector<1x64xf32>
    %155 = vector.broadcast %154 : vector<1x64xf32> to vector<4x64xf32>
    %156 = arith.addf %152, %155 : vector<4x64xf32>
    %157 = math.tanh %156 : vector<4x64xf32>
    %c144 = arith.constant 144 : index
    %c0_61 = arith.constant 0 : index
    %158 = vector.load %arg5[%c144, %c0_61] : memref<208x64xf32, #tpu.memory_space<vmem>>, vector<64x32xf32>
    %cst_62 = arith.constant dense<0.000000e+00> : vector<4x32xf32>
    %159 = tpu.matmul %157, %158, %cst_62 {dimension_numbers = #tpu.dot_dimension_numbers<[1], [0], [0], [1], [0, 0, 1, 1], [], []>} : vector<4x64xf32>, vector<64x32xf32>, vector<4x32xf32> -> vector<4x32xf32>
    %c6 = arith.constant 6 : index
    %c0_63 = arith.constant 0 : index
    %160 = vector.load %arg6[%c6, %c0_63] : memref<9x64xf32, #tpu.memory_space<vmem>>, vector<1x32xf32>
    %161 = vector.broadcast %160 : vector<1x32xf32> to vector<4x32xf32>
    %162 = arith.addf %159, %161 : vector<4x32xf32>
    %c7 = arith.constant 7 : index
    %c0_64 = arith.constant 0 : index
    %163 = vector.load %arg6[%c7, %c0_64] : memref<9x64xf32, #tpu.memory_space<vmem>>, vector<1x32xf32>
    %c8_65 = arith.constant 8 : index
    %c0_66 = arith.constant 0 : index
    %164 = vector.load %arg6[%c8_65, %c0_66] : memref<9x64xf32, #tpu.memory_space<vmem>>, vector<1x32xf32>
    %cst_67 = arith.constant dense<0.000000e+00> : vector<32xf32>
    %165 = vector.multi_reduction <add>, %162, %cst_67 [0] : vector<4x32xf32> to vector<32xf32>
    %166 = vector.shape_cast %165 : vector<32xf32> to vector<1x32xf32>
    %167 = arith.mulf %162, %162 : vector<4x32xf32>
    %cst_68 = arith.constant dense<0.000000e+00> : vector<32xf32>
    %168 = vector.multi_reduction <add>, %167, %cst_68 [0] : vector<4x32xf32> to vector<32xf32>
    %169 = vector.shape_cast %168 : vector<32xf32> to vector<1x32xf32>
    %cst_69 = arith.constant 2.500000e-01 : f32
    %170 = vector.broadcast %cst_69 : f32 to vector<1x32xf32>
    %171 = arith.mulf %166, %170 : vector<1x32xf32>
    %cst_70 = arith.constant 2.500000e-01 : f32
    %172 = vector.broadcast %cst_70 : f32 to vector<1x32xf32>
    %173 = arith.mulf %169, %172 : vector<1x32xf32>
    %174 = arith.mulf %171, %171 : vector<1x32xf32>
    %175 = arith.subf %173, %174 : vector<1x32xf32>
    %cst_71 = arith.constant 0.000000e+00 : f32
    %176 = vector.broadcast %cst_71 : f32 to vector<1x32xf32>
    %177 = arith.maximumf %175, %176 : vector<1x32xf32>
    %cst_72 = arith.constant 9.99999974E-6 : f32
    %178 = vector.broadcast %cst_72 : f32 to vector<1x32xf32>
    %179 = arith.addf %177, %178 : vector<1x32xf32>
    %180 = math.rsqrt %179 : vector<1x32xf32>
    %181 = arith.mulf %163, %180 : vector<1x32xf32>
    %182 = vector.broadcast %181 : vector<1x32xf32> to vector<4x32xf32>
    %183 = arith.mulf %162, %182 : vector<4x32xf32>
    %184 = arith.mulf %171, %181 : vector<1x32xf32>
    %185 = arith.subf %164, %184 : vector<1x32xf32>
    %186 = vector.broadcast %185 : vector<1x32xf32> to vector<4x32xf32>
    %187 = arith.addf %183, %186 : vector<4x32xf32>
    %cst_73 = arith.constant 0.000000e+00 : f32
    %188 = vector.broadcast %cst_73 : f32 to vector<4x24xf32>
    %189 = tpu.concatenate %91, %187, %188 in 1 : vector<4x72xf32>, vector<4x32xf32>, vector<4x24xf32> -> vector<4x128xf32>
    %c0_74 = arith.constant 0 : index
    %c0_75 = arith.constant 0 : index
    %190 = vector.load %arg7[%c0_74, %c0_75] : memref<4x128xf32, #tpu.memory_space<vmem>>, vector<4x128xf32>
    tpu.vector_store %arg7[%c0_74, %c0_75], %189 {strides = array<i32>} : memref<4x128xf32, #tpu.memory_space<vmem>>, vector<4x128xf32>,
    return
  }
}

</mosaic_0001>

<llo_original>
// kernel: tpu_custom_call.1
$region0: #{tpu_custom_call.1}
  #allocation0 [shape = 'u32[]', space=smem, size = 0x4, offset = 0x4, fixed_abs, tag = 'smem constant byte address 0x4 - core index']
  #allocation1 [shape = 'u32[144,128]{1,0:T(1,128)}', space=vmem, size = 0x12000, scoped, tag = 'internal scratch']
  %s0 = inlined_call_operand.vmem [shape: f32[40,36], index: 0, kind: input, shape index: {}]
  %s1 = inlined_call_operand.vmem [shape: s32[40,1], index: 1, kind: input, shape index: {}]
  %s2 = inlined_call_operand.vmem [shape: f32[4,8], index: 2, kind: input, shape index: {}]
  %s3 = inlined_call_operand.vmem [shape: f32[36,72], index: 3, kind: input, shape index: {}]
  %s4 = inlined_call_operand.vmem [shape: f32[6,72], index: 4, kind: input, shape index: {}]
  %s5 = inlined_call_operand.vmem [shape: f32[208,64], index: 5, kind: input, shape index: {}]
  %s6 = inlined_call_operand.vmem [shape: f32[9,64], index: 6, kind: input, shape index: {}]
  %s7 = inlined_call_operand.hbm [shape: f32[4,128], index: 7, kind: output, shape index: {}]
  %s8 = sld [smem:[#allocation0]]
  $region38: #{tpu_custom_call.1} parent=0
    _
  %s10 = ssub.s32 1, %s8
  %s11 = scalar_select 0, %s10, %s8
  $region1: #{tpu_custom_call.1} parent=0
    #allocation2 [shape = 'u8[2048]{0}', space=vmem, size = 0x800, scoped, tag = 'output window, operand 0, single buffered']
    #allocation3 [shape = 's32[1]{0}', space=sflag, size = 0x4, scoped, tag = 'scoped memory for tpu_custom_call.1']
    %12 = vsyncpa [#allocation3], 0
    // Predicated region
    $region2: #{tpu_custom_call.1} parent=1 // pred_check
      _
    $region3: #{tpu_custom_call.1} parent=1 // pred_check_branch
      %14 = sbr.rel (0) target = $region5
    $region4: #{tpu_custom_call.1} parent=1 // pred_region
      _
    $region5: #{tpu_custom_call.1} parent=1 // pred_fallthru
      _
    // Predicated region
    $region6: #{tpu_custom_call.1} parent=1 // pred_check
      _
    $region7: #{tpu_custom_call.1} parent=1 // pred_check_branch
      %16 = sbr.rel (0) target = $region9
    $region8: #{tpu_custom_call.1} parent=1 // pred_region
      _
    $region9: #{tpu_custom_call.1} parent=1 // pred_fallthru
      _
    // Predicated region
    $region10: #{tpu_custom_call.1} parent=1 // pred_check
      _
    $region11: #{tpu_custom_call.1} parent=1 // pred_check_branch
      %18 = sbr.rel (0) target = $region13
    $region12: #{tpu_custom_call.1} parent=1 // pred_region
      _
    $region13: #{tpu_custom_call.1} parent=1 // pred_fallthru
      _
    // Predicated region
    $region14: #{tpu_custom_call.1} parent=1 // pred_check
      _
    $region15: #{tpu_custom_call.1} parent=1 // pred_check_branch
      %20 = sbr.rel (0) target = $region17
    $region16: #{tpu_custom_call.1} parent=1 // pred_region
      _
    $region17: #{tpu_custom_call.1} parent=1 // pred_fallthru
      _
    // Predicated region
    $region18: #{tpu_custom_call.1} parent=1 // pred_check
      _
    $region19: #{tpu_custom_call.1} parent=1 // pred_check_branch
      %22 = sbr.rel (0) target = $region21
    $region20: #{tpu_custom_call.1} parent=1 // pred_region
      _
    $region21: #{tpu_custom_call.1} parent=1 // pred_fallthru
      _
    // Predicated region
    $region22: #{tpu_custom_call.1} parent=1 // pred_check
      _
    $region23: #{tpu_custom_call.1} parent=1 // pred_check_branch
      %24 = sbr.rel (0) target = $region25
    $region24: #{tpu_custom_call.1} parent=1 // pred_region
      _
    $region25: #{tpu_custom_call.1} parent=1 // pred_fallthru
      _
    // Predicated region
    $region26: #{tpu_custom_call.1} parent=1 // pred_check
      _
    $region27: #{tpu_custom_call.1} parent=1 // pred_check_branch
      %26 = sbr.rel (0) target = $region29
    $region28: #{tpu_custom_call.1} parent=1 // pred_region
      _
    $region29: #{tpu_custom_call.1} parent=1 // pred_fallthru
      _
    %v27 = vlaneseq
    %v28 = vshrl.u32 %v27, 7
    %v29 = vadd.s32 %v28, 8
    %v30 = vadd.s32 %v28, 16
    %v31 = vadd.s32 %v28, 24
    %v32 = vadd.s32 %v28, 32
    %vm33 = vcmp.ge.s32.totalorder %v28, 20
    %vm34 = vcmp.ge.s32.totalorder %v29, 20
    %vm35 = vcmp.ge.s32.totalorder %v30, 20
    %vm36 = vcmp.ge.s32.totalorder %v31, 20
    %vm37 = vcmp.ge.s32.totalorder %v32, 20
    %v38 = vsel %vm33, 1, 0
    %v39 = vsel %vm34, 1, 0
    %v40 = vsel %vm35, 1, 0
    %v41 = vsel %vm36, 1, 0
    %v42 = vsel %vm37, 1, 0
    %vm43 = vcmp.ge.s32.totalorder %v28, 32
    %vm44 = vcmp.ge.s32.totalorder %v29, 32
    %vm45 = vcmp.ge.s32.totalorder %v30, 32
    %vm46 = vcmp.ge.s32.totalorder %v31, 32
    %vm47 = vcmp.ge.s32.totalorder %v32, 32
    %v48 = vsel %vm43, 1, 0
    %v49 = vsel %vm44, 1, 0
    %v50 = vsel %vm45, 1, 0
    %v51 = vsel %vm46, 1, 0
    %v52 = vsel %vm47, 1, 0
    %v53 = vadd.s32 %v38, %v48
    %v54 = vadd.s32 %v39, %v49
    %v55 = vadd.s32 %v40, %v50
    %v56 = vadd.s32 %v41, %v51
    %v57 = vadd.s32 %v42, %v52
    %v58 = vlaneseq
    %v59 = vand.u32 %v58, 127
    %vm60 = vcmp.ge.s32.totalorder %v59, 32
    %v61 = vsel %vm60, 1, 0
    %vm62 = vcmp.ge.s32.totalorder %v59, 56
    %v63 = vsel %vm62, 1, 0
    %v64 = vadd.s32 %v61, %v63
    %vm65 = vcmp.eq.s32.totalorder %v53, %v64
    %vm66 = vcmp.eq.s32.totalorder %v54, %v64
    %vm67 = vcmp.eq.s32.totalorder %v55, %v64
    %vm68 = vcmp.eq.s32.totalorder %v56, %v64
    %vm69 = vcmp.eq.s32.totalorder %v57, %v64
    %v70 = vsel %vm65, 1, 0
    %v71 = vsel %vm66, 1, 0
    %v72 = vsel %vm67, 1, 0
    %v73 = vsel %vm68, 1, 0
    %v74 = vsel %vm69, 1, 0
    %v75 = vcvt.s32.f32 %v70
    %v76 = vcvt.s32.f32 %v71
    %v77 = vcvt.s32.f32 %v72
    %v78 = vcvt.s32.f32 %v73
    %v79 = vcvt.s32.f32 %v74
    %v80 = vld [vmem:[%s4] sm:$0x1]
    %v81 = vld [vmem:[%s4 + $0x1] sm:$0x1]
    %v82 = vld [vmem:[%s4 + $0x2] sm:$0x1]
    %v83 = vld [vmem:[%s4 + $0x3] sm:$0x1]
    %v84 = vld [vmem:[%s4 + $0x4] sm:$0x1]
    %v85 = vld [vmem:[%s4 + $0x5] sm:$0x1]
    %v86 = vld [vmem:[%s0] sm:$0xff]
    %v87 = vld [vmem:[%s0 + $0x8] sm:$0xff]
    %v88 = vld [vmem:[%s0 + $0x10] sm:$0xff]
    %v89 = vld [vmem:[%s0 + $0x18] sm:$0xff]
    %v90 = vld [vmem:[%s0 + $0x20] sm:$0xff]
    %v91 = vld [vmem:[%s3] sm:$0xff]
    %v92 = vld [vmem:[%s3 + $0x8] sm:$0xff]
    %v93 = vld [vmem:[%s3 + $0x10] sm:$0xff]
    %v94 = vld [vmem:[%s3 + $0x18] sm:$0xff]
    %v95 = vld [vmem:[%s3 + $0x20] sm:$0xf]
    %vm96 = vcmask 293888
    %v98 = vsel %vm96, %v86, 0
    %v101 = vsel %vm96, %v87, 0
    %v104 = vsel %vm96, %v88, 0
    %v107 = vsel %vm96, %v89, 0
    %v110 = vsel %vm96, %v90, 0
    %vm112 = vcmask 1043456
    %v114 = vsel %vm112, %v95, 0
    %116 = vmatprep.subr.mxu0 0.0
    %117 = vmatpush1.msra.mxu0 0.0
    %118 = vmatprep.subr.mxu0 0.0
    %119 = vmatpush1.msra.mxu0 0.0
    %120 = vmatprep.subr.mxu0 0.0
    %121 = vmatpush1.msra.mxu0 0.0
    %122 = vmatprep.subr.mxu0 0.0
    %123 = vmatpush1.msra.mxu0 0.0
    %124 = vmatprep.subr.mxu0 0.0
    %125 = vmatpush1.msra.mxu0 0.0
    %126 = vmatprep.subr.mxu0 0.0
    %127 = vmatpush1.msra.mxu0 0.0
    %128 = vmatprep.subr.mxu0 0.0
    %129 = vmatpush1.msra.mxu0 0.0
    %130 = vmatprep.subr.mxu0 0.0
    %131 = vmatpush1.msra.mxu0 0.0
    %132 = vmatprep.subr.mxu0 0.0
    %133 = vmatpush1.msra.mxu0 0.0
    %134 = vmatprep.subr.mxu0 0.0
    %135 = vmatpush1.msra.mxu0 0.0
    %136 = vmatprep.subr.mxu0 0.0
    %137 = vmatpush1.msra.mxu0 0.0
    %138 = vmatprep.subr.mxu0 0.0
    %139 = vmatpush1.msra.mxu0 %v114
    %140 = vmatprep.subr.mxu0 0.0
    %141 = vmatpush1.msra.mxu0 %v94
    %142 = vmatprep.subr.mxu0 0.0
    %143 = vmatpush1.msra.mxu0 %v93
    %144 = vmatprep.subr.mxu0 0.0
    %145 = vmatpush1.msra.mxu0 %v92
    %146 = vmatprep.subr.mxu0 0.0
    %147 = vmatpush1.msra.mxu0 %v91
    %148 = vmatprep.subr.mxu0 0.0
    %149 = vmatpush2.msra.mxu0 0.0
    %150 = vmatprep.subr.mxu0 0.0
    %151 = vmatpush2.msra.mxu0 0.0
    %152 = vmatprep.subr.mxu0 0.0
    %153 = vmatpush2.msra.mxu0 0.0
    %154 = vmatprep.subr.mxu0 0.0
    %155 = vmatpush2.msra.mxu0 0.0
    %156 = vmatprep.subr.mxu0 0.0
    %157 = vmatpush2.msra.mxu0 0.0
    %158 = vmatprep.subr.mxu0 0.0
    %159 = vmatpush2.msra.mxu0 0.0
    %160 = vmatprep.subr.mxu0 0.0
    %161 = vmatpush2.msra.mxu0 0.0
    %162 = vmatprep.subr.mxu0 0.0
    %163 = vmatpush2.msra.mxu0 0.0
    %164 = vmatprep.subr.mxu0 0.0
    %165 = vmatpush2.msra.mxu0 0.0
    %166 = vmatprep.subr.mxu0 0.0
    %167 = vmatpush2.msra.mxu0 0.0
    %168 = vmatprep.subr.mxu0 0.0
    %169 = vmatpush2.msra.mxu0 0.0
    %170 = vmatprep.subr.mxu0 0.0
    %171 = vmatpush2.msra.mxu0 0.0
    %172 = vmatprep.subr.mxu0 0.0
    %173 = vmatpush2.msra.mxu0 0.0
    %174 = vmatprep.subr.mxu0 0.0
    %175 = vmatpush2.msra.mxu0 0.0
    %176 = vmatprep.subr.mxu0 0.0
    %177 = vmatpush2.msra.mxu0 0.0
    %178 = vmatprep.subr.mxu0 0.0
    %179 = vmatpush2.msra.mxu0 0.0
    %180 = vmatprep.mubr.f32.mxu0 0.0
    %181 = vmatmul.mubr.f32.gmra.mxu0 %v98
    %v182 = vpop.f32.mrf.mxu0
    %v183 = vadd.f32 0.0, %v182
    %v184 = vpop.f32.mrf.mxu0
    %185 = vmatprep.mubr.f32.mxu0 0.0
    %186 = vmatmul.mubr.f32.gmra.mxu0 %v101
    %v187 = vpop.f32.mrf.mxu0
    %v188 = vadd.f32 0.0, %v187
    %v189 = vpop.f32.mrf.mxu0
    %190 = vmatprep.mubr.f32.mxu0 0.0
    %191 = vmatmul.mubr.f32.gmra.mxu0 %v104
    %v192 = vpop.f32.mrf.mxu0
    %v193 = vadd.f32 0.0, %v192
    %v194 = vpop.f32.mrf.mxu0
    %195 = vmatprep.mubr.f32.mxu0 0.0
    %196 = vmatmul.mubr.f32.gmra.mxu0 %v107
    %v197 = vpop.f32.mrf.mxu0
    %v198 = vadd.f32 0.0, %v197
    %v199 = vpop.f32.mrf.mxu0
    %200 = vmatprep.mubr.f32.mxu0 0.0
    %201 = vmatmul.mubr.f32.gmra.mxu0 %v110
    %v202 = vpop.f32.mrf.mxu0
    %v203 = vadd.f32 0.0, %v202
    %v204 = vpop.f32.mrf.mxu0
    %205 = vdwg.mxu0
    %v206 = vlaneseq
    %v207 = vshrl.u32 %v206, 7
    %v208 = vsub.s32 0, %v207
    %v209 = vrot.slane %v80, %v208
    %v210 = vmul.f32 %v75, %v209
    %v211 = vmul.f32 %v76, %v209
    %v212 = vmul.f32 %v77, %v209
    %v213 = vmul.f32 %v78, %v209
    %v214 = vmul.f32 %v79, %v209
    %v215 = vadd.f32 %v183, %v210
    %v216 = vadd.f32 %v188, %v211
    %v217 = vadd.f32 %v193, %v212
    %v218 = vadd.f32 %v198, %v213
    %v219 = vadd.f32 %v203, %v214
    %v220 = vadd.f32 %v80, %v81
    %v221 = vlaneseq
    %v222 = vshrl.u32 %v221, 7
    %v223 = vsub.s32 0, %v222
    %v224 = vrot.slane %v220, %v223
    %v225 = vmul.f32 %v75, %v224
    %v226 = vmul.f32 %v76, %v224
    %v227 = vmul.f32 %v77, %v224
    %v228 = vmul.f32 %v78, %v224
    %v229 = vmul.f32 %v79, %v224
    %v230 = vadd.f32 %v183, %v225
    %v231 = vadd.f32 %v188, %v226
    %v232 = vadd.f32 %v193, %v227
    %v233 = vadd.f32 %v198, %v228
    %v234 = vadd.f32 %v203, %v229
    %v235 = vmul.f32 %v230, 0.2
    %v236 = vmul.f32 %v231, 0.2
    %v237 = vmul.f32 %v232, 0.2
    %v238 = vmul.f32 %v233, 0.2
    %v239 = vmul.f32 %v234, 0.2
    %v240 = vmax.f32 %v230, %v235
    %v241 = vmax.f32 %v231, %v236
    %v242 = vmax.f32 %v232, %v237
    %v243 = vmax.f32 %v233, %v238
    %v244 = vmax.f32 %v234, %v239
    %v245 = vlaneseq
    %v246 = vshrl.u32 %v245, 7
    %v247 = vsub.s32 0, %v246
    %v248 = vrot.slane %v82, %v247
    %v249 = vmul.f32 %v240, %v248
    %v250 = vmul.f32 %v241, %v248
    %v251 = vmul.f32 %v242, %v248
    %v252 = vmul.f32 %v243, %v248
    %v253 = vmul.f32 %v244, %v248
    %vm254 = vcmask 588800
    %v255 = vsel %vm254, %v249, 0.0
    %256 = vadd.xlane.f32.xlu0 %v255
    %v257 = vpop.xlane.xlu0 %256
    %v258 = vsel %vm254, %v250, 0.0
    %259 = vadd.xlane.f32.xlu0 %v258
    %v260 = vpop.xlane.xlu0 %259
    %v261 = vsel %vm254, %v251, 0.0
    %262 = vadd.xlane.f32.xlu0 %v261
    %v263 = vpop.xlane.xlu0 %262
    %v264 = vsel %vm254, %v252, 0.0
    %265 = vadd.xlane.f32.xlu0 %v264
    %v266 = vpop.xlane.xlu0 %265
    %v267 = vsel %vm254, %v253, 0.0
    %268 = vadd.xlane.f32.xlu0 %v267
    %v269 = vpop.xlane.xlu0 %268
    %v270 = vld [vmem:[%s1] sm:$0xff]
    %v271 = vld [vmem:[%s1 + $0x8] sm:$0xff]
    %v272 = vld [vmem:[%s1 + $0x10] sm:$0xff]
    %v273 = vld [vmem:[%s1 + $0x18] sm:$0xff]
    %v274 = vld [vmem:[%s1 + $0x20] sm:$0xff]
    %275 = vset.pattern.permute.xlu0 0
    %276 = vperm.xlu0 %275, %v270
    %v277 = vpop.permute.xlu0 %276
    %278 = vset.pattern.permute.xlu0 0
    %279 = vperm.xlu0 %278, %v271
    %v280 = vpop.permute.xlu0 %279
    %281 = vset.pattern.permute.xlu0 0
    %282 = vperm.xlu0 %281, %v272
    %v283 = vpop.permute.xlu0 %282
    %284 = vset.pattern.permute.xlu0 0
    %285 = vperm.xlu0 %284, %v273
    %v286 = vpop.permute.xlu0 %285
    %287 = vset.pattern.permute.xlu0 0
    %288 = vperm.xlu0 %287, %v274
    %v289 = vpop.permute.xlu0 %288
    %vm290 = vcmp.eq.s32.totalorder %v277, %v59
    %vm291 = vcmp.eq.s32.totalorder %v280, %v59
    %vm292 = vcmp.eq.s32.totalorder %v283, %v59
    %vm293 = vcmp.eq.s32.totalorder %v286, %v59
    %vm294 = vcmp.eq.s32.totalorder %v289, %v59
    %v295 = vsel %vm290, %v257, -inf
    %v296 = vsel %vm291, %v260, -inf
    %v297 = vsel %vm292, %v263, -inf
    %v298 = vsel %vm293, %v266, -inf
    %v299 = vsel %vm294, %v269, -inf
    %vm300 = vcmask 31744
    %v301 = vsel %vm300, %v295, -inf
    %v302 = vsel %vm300, %v296, -inf
    %v303 = vsel %vm300, %v297, -inf
    %v304 = vsel %vm300, %v298, -inf
    %v305 = vsel %vm300, %v299, -inf
    %v306 = vmax.f32 %v301, %v305
    %v307 = vmax.f32 %v306, %v302
    %v308 = vmax.f32 %v303, %v304
    %v309 = vmax.f32 %v307, %v308
    %v310 = vrot.slane %v309, 4
    %v311 = vmax.f32 %v309, %v310
    %v312 = vrot.slane %v311, 2
    %v313 = vmax.f32 %v311, %v312
    %v314 = vrot.slane %v313, 1
    %v315 = vmax.f32 %v313, %v314
    %v316 = vmax.f32 %v315, -1e+30
    %v317 = vsub.f32 %v295, %v316
    %v318 = vsub.f32 %v296, %v316
    %v319 = vsub.f32 %v297, %v316
    %v320 = vsub.f32 %v298, %v316
    %v321 = vsub.f32 %v299, %v316
    %v322 = vmul.f32 %v317, 1.442695
    %v323 = vpow.pop %v322
    %v324 = vmul.f32 %v318, 1.442695
    %v325 = vpow.pop %v324
    %v326 = vmul.f32 %v319, 1.442695
    %v327 = vpow.pop %v326
    %v328 = vmul.f32 %v320, 1.442695
    %v329 = vpow.pop %v328
    %v330 = vmul.f32 %v321, 1.442695
    %v331 = vpow.pop %v330
    %v332 = vsel %vm290, %v323, 0.0
    %v333 = vsel %vm291, %v325, 0.0
    %v334 = vsel %vm292, %v327, 0.0
    %v335 = vsel %vm293, %v329, 0.0
    %v336 = vsel %vm294, %v331, 0.0
    %337 = vxpose.xlu0.b32.start [1/16] %v332, 128
    %338 = vxpose.xlu0.b32.cont [2/16] %v333, 128
    %339 = vxpose.xlu0.b32.cont [3/16] %v334, 128
    %340 = vxpose.xlu0.b32.cont [4/16] %v335, 128
    %341 = vxpose.xlu0.b32.cont [5/16] %v336, 128
    %342 = vxpose.xlu0.b32.cont [6/16] 0.0, 128
    %343 = vxpose.xlu0.b32.cont [7/16] 0.0, 128
    %344 = vxpose.xlu0.b32.cont [8/16] 0.0, 128
    %345 = vxpose.xlu0.b32.cont [9/16] 0.0, 128
    %346 = vxpose.xlu0.b32.cont [10/16] 0.0, 128
    %347 = vxpose.xlu0.b32.cont [11/16] 0.0, 128
    %348 = vxpose.xlu0.b32.cont [12/16] 0.0, 128
    %349 = vxpose.xlu0.b32.cont [13/16] 0.0, 128
    %350 = vxpose.xlu0.b32.cont [14/16] 0.0, 128
    %351 = vxpose.xlu0.b32.cont [15/16] 0.0, 128
    %352 = vxpose.xlu0.b32.end [16/16] 0.0, 128
    %v353 = vpop.trf.xlu0
    %v354 = vpop.trf.xlu0
    %v355 = vpop.trf.xlu0
    %v356 = vpop.trf.xlu0
    %v357 = vpop.trf.xlu0
    %v358 = vpop.trf.xlu0
    %v359 = vpop.trf.xlu0
    %v360 = vpop.trf.xlu0
    %v361 = vpop.trf.xlu0
    %v362 = vpop.trf.xlu0
    %v363 = vpop.trf.xlu0
    %v364 = vpop.trf.xlu0
    %v365 = vpop.trf.xlu0
    %v366 = vpop.trf.xlu0
    %v367 = vpop.trf.xlu0
    %v368 = vpop.trf.xlu0
    %vm369 = vcmask 326656
    %v371 = vsel %vm369, %v353, 0
    %373 = vmatprep.subr.mxu0 0.0
    %374 = vmatpush1.msra.mxu0 0.0
    %375 = vmatprep.subr.mxu0 0.0
    %376 = vmatpush1.msra.mxu0 0.0
    %377 = vmatprep.subr.mxu0 0.0
    %378 = vmatpush1.msra.mxu0 0.0
    %379 = vmatprep.subr.mxu0 0.0
    %380 = vmatpush1.msra.mxu0 0.0
    %381 = vmatprep.subr.mxu0 0.0
    %382 = vmatpush1.msra.mxu0 0.0
    %383 = vmatprep.subr.mxu0 0.0
    %384 = vmatpush1.msra.mxu0 0.0
    %385 = vmatprep.subr.mxu0 0.0
    %386 = vmatpush1.msra.mxu0 0.0
    %387 = vmatprep.subr.mxu0 0.0
    %388 = vmatpush1.msra.mxu0 0.0
    %389 = vmatprep.subr.mxu0 0.0
    %390 = vmatpush1.msra.mxu0 0.0
    %391 = vmatprep.subr.mxu0 0.0
    %392 = vmatpush1.msra.mxu0 0.0
    %393 = vmatprep.subr.mxu0 0.0
    %394 = vmatpush1.msra.mxu0 0.0
    %395 = vmatprep.subr.mxu0 0.0
    %396 = vmatpush1.msra.mxu0 %v219
    %397 = vmatprep.subr.mxu0 0.0
    %398 = vmatpush1.msra.mxu0 %v218
    %399 = vmatprep.subr.mxu0 0.0
    %400 = vmatpush1.msra.mxu0 %v217
    %401 = vmatprep.subr.mxu0 0.0
    %402 = vmatpush1.msra.mxu0 %v216
    %403 = vmatprep.subr.mxu0 0.0
    %404 = vmatpush1.msra.mxu0 %v215
    %405 = vmatprep.subr.mxu0 0.0
    %406 = vmatpush2.msra.mxu0 0.0
    %407 = vmatprep.subr.mxu0 0.0
    %408 = vmatpush2.msra.mxu0 0.0
    %409 = vmatprep.subr.mxu0 0.0
    %410 = vmatpush2.msra.mxu0 0.0
    %411 = vmatprep.subr.mxu0 0.0
    %412 = vmatpush2.msra.mxu0 0.0
    %413 = vmatprep.subr.mxu0 0.0
    %414 = vmatpush2.msra.mxu0 0.0
    %415 = vmatprep.subr.mxu0 0.0
    %416 = vmatpush2.msra.mxu0 0.0
    %417 = vmatprep.subr.mxu0 0.0
    %418 = vmatpush2.msra.mxu0 0.0
    %419 = vmatprep.subr.mxu0 0.0
    %420 = vmatpush2.msra.mxu0 0.0
    %421 = vmatprep.subr.mxu0 0.0
    %422 = vmatpush2.msra.mxu0 0.0
    %423 = vmatprep.subr.mxu0 0.0
    %424 = vmatpush2.msra.mxu0 0.0
    %425 = vmatprep.subr.mxu0 0.0
    %426 = vmatpush2.msra.mxu0 0.0
    %427 = vmatprep.subr.mxu0 0.0
    %428 = vmatpush2.msra.mxu0 0.0
    %429 = vmatprep.subr.mxu0 0.0
    %430 = vmatpush2.msra.mxu0 0.0
    %431 = vmatprep.subr.mxu0 0.0
    %432 = vmatpush2.msra.mxu0 0.0
    %433 = vmatprep.subr.mxu0 0.0
    %434 = vmatpush2.msra.mxu0 0.0
    %435 = vmatprep.subr.mxu0 0.0
    %436 = vmatpush2.msra.mxu0 0.0
    %437 = vmatprep.mubr.f32.mxu0 0.0
    %438 = vmatmul.mubr.f32.gmra.mxu0 %v371
    %v439 = vpop.f32.mrf.mxu0
    %v440 = vadd.f32 0.0, %v439
    %v441 = vpop.f32.mrf.mxu0
    %442 = vdwg.mxu0
    %443 = vmatprep.subr.mxu0 0.0
    %444 = vmatpush1.msra.mxu0 0.0
    %445 = vmatprep.subr.mxu0 0.0
    %446 = vmatpush1.msra.mxu0 0.0
    %447 = vmatprep.subr.mxu0 0.0
    %448 = vmatpush1.msra.mxu0 0.0
    %449 = vmatprep.subr.mxu0 0.0
    %450 = vmatpush1.msra.mxu0 0.0
    %451 = vmatprep.subr.mxu0 0.0
    %452 = vmatpush1.msra.mxu0 0.0
    %453 = vmatprep.subr.mxu0 0.0
    %454 = vmatpush1.msra.mxu0 0.0
    %455 = vmatprep.subr.mxu0 0.0
    %456 = vmatpush1.msra.mxu0 0.0
    %457 = vmatprep.subr.mxu0 0.0
    %458 = vmatpush1.msra.mxu0 0.0
    %459 = vmatprep.subr.mxu0 0.0
    %460 = vmatpush1.msra.mxu0 0.0
    %461 = vmatprep.subr.mxu0 0.0
    %462 = vmatpush1.msra.mxu0 0.0
    %463 = vmatprep.subr.mxu0 0.0
    %464 = vmatpush1.msra.mxu0 0.0
    %465 = vmatprep.subr.mxu0 0.0
    %466 = vmatpush1.msra.mxu0 %v79
    %467 = vmatprep.subr.mxu0 0.0
    %468 = vmatpush1.msra.mxu0 %v78
    %469 = vmatprep.subr.mxu0 0.0
    %470 = vmatpush1.msra.mxu0 %v77
    %471 = vmatprep.subr.mxu0 0.0
    %472 = vmatpush1.msra.mxu0 %v76
    %473 = vmatprep.subr.mxu0 0.0
    %474 = vmatpush1.msra.mxu0 %v75
    %475 = vmatprep.subr.mxu0 0.0
    %476 = vmatpush2.msra.mxu0 0.0
    %477 = vmatprep.subr.mxu0 0.0
    %478 = vmatpush2.msra.mxu0 0.0
    %479 = vmatprep.subr.mxu0 0.0
    %480 = vmatpush2.msra.mxu0 0.0
    %481 = vmatprep.subr.mxu0 0.0
    %482 = vmatpush2.msra.mxu0 0.0
    %483 = vmatprep.subr.mxu0 0.0
    %484 = vmatpush2.msra.mxu0 0.0
    %485 = vmatprep.subr.mxu0 0.0
    %486 = vmatpush2.msra.mxu0 0.0
    %487 = vmatprep.subr.mxu0 0.0
    %488 = vmatpush2.msra.mxu0 0.0
    %489 = vmatprep.subr.mxu0 0.0
    %490 = vmatpush2.msra.mxu0 0.0
    %491 = vmatprep.subr.mxu0 0.0
    %492 = vmatpush2.msra.mxu0 0.0
    %493 = vmatprep.subr.mxu0 0.0
    %494 = vmatpush2.msra.mxu0 0.0
    %495 = vmatprep.subr.mxu0 0.0
    %496 = vmatpush2.msra.mxu0 0.0
    %497 = vmatprep.subr.mxu0 0.0
    %498 = vmatpush2.msra.mxu0 0.0
    %499 = vmatprep.subr.mxu0 0.0
    %500 = vmatpush2.msra.mxu0 0.0
    %501 = vmatprep.subr.mxu0 0.0
    %502 = vmatpush2.msra.mxu0 0.0
    %503 = vmatprep.subr.mxu0 0.0
    %504 = vmatpush2.msra.mxu0 0.0
    %505 = vmatprep.subr.mxu0 0.0
    %506 = vmatpush2.msra.mxu0 0.0
    %507 = vmatprep.mubr.f32.mxu0 0.0
    %508 = vmatmul.mubr.f32.gmra.mxu0 %v371
    %v509 = vpop.f32.mrf.mxu0
    %v510 = vadd.f32 0.0, %v509
    %v511 = vpop.f32.mrf.mxu0
    %512 = vdwg.mxu0
    %v513 = vmax.f32 %v510, 1e-20
    %v514 = vrcp.pop %v513
    %v515 = vmul.f32 %v440, %v514
    %v516 = vlaneseq
    %v517 = vshrl.u32 %v516, 7
    %v518 = vsub.s32 0, %v517
    %v519 = vrot.slane %v83, %v518
    %v520 = vadd.f32 %v515, %v519
    %vm521 = vcmask 584704
    %v522 = vsel %vm521, %v520, 0.0
    %v523 = vrot.slane %v522, 4
    %v524 = vadd.f32 %v522, %v523
    %v525 = vrot.slane %v524, 2
    %v526 = vadd.f32 %v524, %v525
    %v527 = vrot.slane %v526, 1
    %v528 = vadd.f32 %v526, %v527
    %v529 = vmul.f32 %v520, %v520
    %v530 = vsel %vm521, %v529, 0.0
    %v531 = vrot.slane %v530, 4
    %v532 = vadd.f32 %v530, %v531
    %v533 = vrot.slane %v532, 2
    %v534 = vadd.f32 %v532, %v533
    %v535 = vrot.slane %v534, 1
    %v536 = vadd.f32 %v534, %v535
    %v537 = vmul.f32 %v528, 0.25
    %v538 = vmul.f32 %v536, 0.25
    %v539 = vmul.f32 %v537, %v537
    %v540 = vsub.f32 %v538, %v539
    %v541 = vmax.f32 %v540, 0.0
    %v542 = vadd.f32 %v541, 1e-05
    %v543 = vrsqrt.pop %v542
    %v544 = vmul.f32 %v84, %v543
    %v545 = vlaneseq
    %v546 = vshrl.u32 %v545, 7
    %v547 = vsub.s32 0, %v546
    %v548 = vrot.slane %v544, %v547
    %v549 = vmul.f32 %v520, %v548
    %v550 = vmul.f32 %v537, %v544
    %v551 = vsub.f32 %v85, %v550
    %v552 = vlaneseq
    %v553 = vshrl.u32 %v552, 7
    %v554 = vsub.s32 0, %v553
    %v555 = vrot.slane %v551, %v554
    %v556 = vadd.f32 %v549, %v555
    %v557 = vld [vmem:[%s2] sm:$0xf]
    %v558 = vld [vmem:[%s5] sm:$0xff]
    %v559 = vld [vmem:[%s5 + $0x8] sm:$0xff]
    %v560 = vld [vmem:[%s5 + $0x10] sm:$0xff]
    %v561 = vld [vmem:[%s5 + $0x18] sm:$0xff]
    %v562 = vld [vmem:[%s5 + $0x20] sm:$0xff]
    %v563 = vld [vmem:[%s5 + $0x28] sm:$0xff]
    %v564 = vld [vmem:[%s5 + $0x30] sm:$0xff]
    %v565 = vld [vmem:[%s5 + $0x38] sm:$0xff]
    %v566 = vld [vmem:[%s5 + $0x40] sm:$0xff]
    %v567 = vld [vmem:[%s5 + $0x48] sm:$0xff]
    %v569 = vsel %vm254, %v556, 0
    %571 = vmatprep.subr.mxu0 0.0
    %572 = vmatpush1.msra.mxu0 0.0
    %573 = vmatprep.subr.mxu0 0.0
    %574 = vmatpush1.msra.mxu0 0.0
    %575 = vmatprep.subr.mxu0 0.0
    %576 = vmatpush1.msra.mxu0 0.0
    %577 = vmatprep.subr.mxu0 0.0
    %578 = vmatpush1.msra.mxu0 0.0
    %579 = vmatprep.subr.mxu0 0.0
    %580 = vmatpush1.msra.mxu0 0.0
    %581 = vmatprep.subr.mxu0 0.0
    %582 = vmatpush1.msra.mxu0 0.0
    %583 = vmatprep.subr.mxu0 0.0
    %584 = vmatpush1.msra.mxu0 0.0
    %585 = vmatprep.subr.mxu0 0.0
    %586 = vmatpush1.msra.mxu0 %v567
    %587 = vmatprep.subr.mxu0 0.0
    %588 = vmatpush1.msra.mxu0 %v566
    %589 = vmatprep.subr.mxu0 0.0
    %590 = vmatpush1.msra.mxu0 %v565
    %591 = vmatprep.subr.mxu0 0.0
    %592 = vmatpush1.msra.mxu0 %v564
    %593 = vmatprep.subr.mxu0 0.0
    %594 = vmatpush1.msra.mxu0 %v563
    %595 = vmatprep.subr.mxu0 0.0
    %596 = vmatpush1.msra.mxu0 %v562
    %597 = vmatprep.subr.mxu0 0.0
    %598 = vmatpush1.msra.mxu0 %v561
    %599 = vmatprep.subr.mxu0 0.0
    %600 = vmatpush1.msra.mxu0 %v560
    %601 = vmatprep.subr.mxu0 0.0
    %602 = vmatpush1.msra.mxu0 %v559
    %603 = vmatprep.subr.mxu0 0.0
    %604 = vmatpush2.msra.mxu0 0.0
    %605 = vmatprep.subr.mxu0 0.0
    %606 = vmatpush2.msra.mxu0 0.0
    %607 = vmatprep.subr.mxu0 0.0
    %608 = vmatpush2.msra.mxu0 0.0
    %609 = vmatprep.subr.mxu0 0.0
    %610 = vmatpush2.msra.mxu0 0.0
    %611 = vmatprep.subr.mxu0 0.0
    %612 = vmatpush2.msra.mxu0 0.0
    %613 = vmatprep.subr.mxu0 0.0
    %614 = vmatpush2.msra.mxu0 0.0
    %615 = vmatprep.subr.mxu0 0.0
    %616 = vmatpush2.msra.mxu0 0.0
    %617 = vmatprep.subr.mxu0 0.0
    %618 = vmatpush2.msra.mxu0 0.0
    %619 = vmatprep.subr.mxu0 0.0
    %620 = vmatpush2.msra.mxu0 0.0
    %621 = vmatprep.subr.mxu0 0.0
    %622 = vmatpush2.msra.mxu0 0.0
    %623 = vmatprep.subr.mxu0 0.0
    %624 = vmatpush2.msra.mxu0 0.0
    %625 = vmatprep.subr.mxu0 0.0
    %626 = vmatpush2.msra.mxu0 0.0
    %627 = vmatprep.subr.mxu0 0.0
    %628 = vmatpush2.msra.mxu0 0.0
    %629 = vmatprep.subr.mxu0 0.0
    %630 = vmatpush2.msra.mxu0 0.0
    %631 = vmatprep.subr.mxu0 0.0
    %632 = vmatpush2.msra.mxu0 0.0
    %633 = vmatprep.subr.mxu0 0.0
    %634 = vmatpush2.msra.mxu0 0.0
    %635 = vmatprep.mubr.f32.mxu0 0.0
    %636 = vmatmul.mubr.f32.gmra.mxu0 %v569
    %v637 = vpop.f32.mrf.mxu0
    %v638 = vadd.f32 0.0, %v637
    %v639 = vpop.f32.mrf.mxu0
    %640 = vdwg.mxu0
    %vm641 = vcmask 64512
    %v643 = vsel %vm641, %v557, 0
    %645 = vmatprep.subr.mxu0 0.0
    %646 = vmatpush1.msra.mxu0 0.0
    %647 = vmatprep.subr.mxu0 0.0
    %648 = vmatpush1.msra.mxu0 0.0
    %649 = vmatprep.subr.mxu0 0.0
    %650 = vmatpush1.msra.mxu0 0.0
    %651 = vmatprep.subr.mxu0 0.0
    %652 = vmatpush1.msra.mxu0 0.0
    %653 = vmatprep.subr.mxu0 0.0
    %654 = vmatpush1.msra.mxu0 0.0
    %655 = vmatprep.subr.mxu0 0.0
    %656 = vmatpush1.msra.mxu0 0.0
    %657 = vmatprep.subr.mxu0 0.0
    %658 = vmatpush1.msra.mxu0 0.0
    %659 = vmatprep.subr.mxu0 0.0
    %660 = vmatpush1.msra.mxu0 0.0
    %661 = vmatprep.subr.mxu0 0.0
    %662 = vmatpush1.msra.mxu0 0.0
    %663 = vmatprep.subr.mxu0 0.0
    %664 = vmatpush1.msra.mxu0 0.0
    %665 = vmatprep.subr.mxu0 0.0
    %666 = vmatpush1.msra.mxu0 0.0
    %667 = vmatprep.subr.mxu0 0.0
    %668 = vmatpush1.msra.mxu0 0.0
    %669 = vmatprep.subr.mxu0 0.0
    %670 = vmatpush1.msra.mxu0 0.0
    %671 = vmatprep.subr.mxu0 0.0
    %672 = vmatpush1.msra.mxu0 0.0
    %673 = vmatprep.subr.mxu0 0.0
    %674 = vmatpush1.msra.mxu0 0.0
    %675 = vmatprep.subr.mxu0 0.0
    %676 = vmatpush1.msra.mxu0 %v558
    %677 = vmatprep.subr.mxu0 0.0
    %678 = vmatpush2.msra.mxu0 0.0
    %679 = vmatprep.subr.mxu0 0.0
    %680 = vmatpush2.msra.mxu0 0.0
    %681 = vmatprep.subr.mxu0 0.0
    %682 = vmatpush2.msra.mxu0 0.0
    %683 = vmatprep.subr.mxu0 0.0
    %684 = vmatpush2.msra.mxu0 0.0
    %685 = vmatprep.subr.mxu0 0.0
    %686 = vmatpush2.msra.mxu0 0.0
    %687 = vmatprep.subr.mxu0 0.0
    %688 = vmatpush2.msra.mxu0 0.0
    %689 = vmatprep.subr.mxu0 0.0
    %690 = vmatpush2.msra.mxu0 0.0
    %691 = vmatprep.subr.mxu0 0.0
    %692 = vmatpush2.msra.mxu0 0.0
    %693 = vmatprep.subr.mxu0 0.0
    %694 = vmatpush2.msra.mxu0 0.0
    %695 = vmatprep.subr.mxu0 0.0
    %696 = vmatpush2.msra.mxu0 0.0
    %697 = vmatprep.subr.mxu0 0.0
    %698 = vmatpush2.msra.mxu0 0.0
    %699 = vmatprep.subr.mxu0 0.0
    %700 = vmatpush2.msra.mxu0 0.0
    %701 = vmatprep.subr.mxu0 0.0
    %702 = vmatpush2.msra.mxu0 0.0
    %703 = vmatprep.subr.mxu0 0.0
    %704 = vmatpush2.msra.mxu0 0.0
    %705 = vmatprep.subr.mxu0 0.0
    %706 = vmatpush2.msra.mxu0 0.0
    %707 = vmatprep.subr.mxu0 0.0
    %708 = vmatpush2.msra.mxu0 0.0
    %709 = vmatprep.mubr.f32.mxu0 0.0
    %710 = vmatmul.mubr.f32.gmra.mxu0 %v643
    %v711 = vpop.f32.mrf.mxu0
    %v712 = vadd.f32 %v638, %v711
    %v713 = vpop.f32.mrf.mxu0
    %714 = vdwg.mxu0
    %v715 = vld [vmem:[%s6] sm:$0x1]
    %v716 = vlaneseq
    %v717 = vshrl.u32 %v716, 7
    %v718 = vsub.s32 0, %v717
    %v719 = vrot.slane %v715, %v718
    %v720 = vadd.f32 %v712, %v719
    %v721 = vld [vmem:[%s6 + $0x1] sm:$0x1]
    %v722 = vld [vmem:[%s6 + $0x2] sm:$0x1]
    %vm723 = vcmask 519168
    %v724 = vsel %vm723, %v720, 0.0
    %v725 = vrot.slane %v724, 4
    %v726 = vadd.f32 %v724, %v725
    %v727 = vrot.slane %v726, 2
    %v728 = vadd.f32 %v726, %v727
    %v729 = vrot.slane %v728, 1
    %v730 = vadd.f32 %v728, %v729
    %v731 = vmul.f32 %v720, %v720
    %v732 = vsel %vm723, %v731, 0.0
    %v733 = vrot.slane %v732, 4
    %v734 = vadd.f32 %v732, %v733
    %v735 = vrot.slane %v734, 2
    %v736 = vadd.f32 %v734, %v735
    %v737 = vrot.slane %v736, 1
    %v738 = vadd.f32 %v736, %v737
    %v739 = vmul.f32 %v730, 0.25
    %v740 = vmul.f32 %v738, 0.25
    %v741 = vmul.f32 %v739, %v739
    %v742 = vsub.f32 %v740, %v741
    %v743 = vmax.f32 %v742, 0.0
    %v744 = vadd.f32 %v743, 1e-05
    %v745 = vrsqrt.pop %v744
    %v746 = vmul.f32 %v721, %v745
    %v747 = vlaneseq
    %v748 = vshrl.u32 %v747, 7
    %v749 = vsub.s32 0, %v748
    %v750 = vrot.slane %v746, %v749
    %v751 = vmul.f32 %v720, %v750
    %v752 = vmul.f32 %v739, %v746
    %v753 = vsub.f32 %v722, %v752
    %v754 = vlaneseq
    %v755 = vshrl.u32 %v754, 7
    %v756 = vsub.s32 0, %v755
    %v757 = vrot.slane %v753, %v756
    %v758 = vadd.f32 %v751, %v757
    %v759 = vtanh.pop %v758
    %v760 = vld [vmem:[%s5 + $0x50] sm:$0xff]
    %v761 = vld [vmem:[%s5 + $0x58] sm:$0xff]
    %v762 = vld [vmem:[%s5 + $0x60] sm:$0xff]
    %v763 = vld [vmem:[%s5 + $0x68] sm:$0xff]
    %v764 = vld [vmem:[%s5 + $0x70] sm:$0xff]
    %v765 = vld [vmem:[%s5 + $0x78] sm:$0xff]
    %v766 = vld [vmem:[%s5 + $0x80] sm:$0xff]
    %v767 = vld [vmem:[%s5 + $0x88] sm:$0xff]
    %v768 = vld [vmem:[%s6 + $0x3] sm:$0x1]
    %v769 = vlaneseq
    %v770 = vshrl.u32 %v769, 7
    %v771 = vsub.s32 0, %v770
    %v772 = vrot.slane %v768, %v771
    %vm773 = vcmask 523264
    %v775 = vsel %vm773, %v759, 0
    %777 = vmatprep.subr.mxu0 0.0
    %778 = vmatpush1.msra.mxu0 0.0
    %779 = vmatprep.subr.mxu0 0.0
    %780 = vmatpush1.msra.mxu0 0.0
    %781 = vmatprep.subr.mxu0 0.0
    %782 = vmatpush1.msra.mxu0 0.0
    %783 = vmatprep.subr.mxu0 0.0
    %784 = vmatpush1.msra.mxu0 0.0
    %785 = vmatprep.subr.mxu0 0.0
    %786 = vmatpush1.msra.mxu0 0.0
    %787 = vmatprep.subr.mxu0 0.0
    %788 = vmatpush1.msra.mxu0 0.0
    %789 = vmatprep.subr.mxu0 0.0
    %790 = vmatpush1.msra.mxu0 0.0
    %791 = vmatprep.subr.mxu0 0.0
    %792 = vmatpush1.msra.mxu0 0.0
    %793 = vmatprep.subr.mxu0 0.0
    %794 = vmatpush1.msra.mxu0 %v767
    %795 = vmatprep.subr.mxu0 0.0
    %796 = vmatpush1.msra.mxu0 %v766
    %797 = vmatprep.subr.mxu0 0.0
    %798 = vmatpush1.msra.mxu0 %v765
    %799 = vmatprep.subr.mxu0 0.0
    %800 = vmatpush1.msra.mxu0 %v764
    %801 = vmatprep.subr.mxu0 0.0
    %802 = vmatpush1.msra.mxu0 %v763
    %803 = vmatprep.subr.mxu0 0.0
    %804 = vmatpush1.msra.mxu0 %v762
    %805 = vmatprep.subr.mxu0 0.0
    %806 = vmatpush1.msra.mxu0 %v761
    %807 = vmatprep.subr.mxu0 0.0
    %808 = vmatpush1.msra.mxu0 %v760
    %809 = vmatprep.subr.mxu0 0.0
    %810 = vmatpush2.msra.mxu0 0.0
    %811 = vmatprep.subr.mxu0 0.0
    %812 = vmatpush2.msra.mxu0 0.0
    %813 = vmatprep.subr.mxu0 0.0
    %814 = vmatpush2.msra.mxu0 0.0
    %815 = vmatprep.subr.mxu0 0.0
    %816 = vmatpush2.msra.mxu0 0.0
    %817 = vmatprep.subr.mxu0 0.0
    %818 = vmatpush2.msra.mxu0 0.0
    %819 = vmatprep.subr.mxu0 0.0
    %820 = vmatpush2.msra.mxu0 0.0
    %821 = vmatprep.subr.mxu0 0.0
    %822 = vmatpush2.msra.mxu0 0.0
    %823 = vmatprep.subr.mxu0 0.0
    %824 = vmatpush2.msra.mxu0 0.0
    %825 = vmatprep.subr.mxu0 0.0
    %826 = vmatpush2.msra.mxu0 0.0
    %827 = vmatprep.subr.mxu0 0.0
    %828 = vmatpush2.msra.mxu0 0.0
    %829 = vmatprep.subr.mxu0 0.0
    %830 = vmatpush2.msra.mxu0 0.0
    %831 = vmatprep.subr.mxu0 0.0
    %832 = vmatpush2.msra.mxu0 0.0
    %833 = vmatprep.subr.mxu0 0.0
    %834 = vmatpush2.msra.mxu0 0.0
    %835 = vmatprep.subr.mxu0 0.0
    %836 = vmatpush2.msra.mxu0 0.0
    %837 = vmatprep.subr.mxu0 0.0
    %838 = vmatpush2.msra.mxu0 0.0
    %839 = vmatprep.subr.mxu0 0.0
    %840 = vmatpush2.msra.mxu0 0.0
    %841 = vmatprep.mubr.f32.mxu0 0.0
    %842 = vmatmul.mubr.f32.gmra.mxu0 %v775
    %v843 = vpop.f32.mrf.mxu0
    %v844 = vadd.f32 %v772, %v843
    %v845 = vpop.f32.mrf.mxu0
    %846 = vdwg.mxu0
    %v847 = vld [vmem:[%s6 + $0x4] sm:$0x1]
    %v848 = vld [vmem:[%s6 + $0x5] sm:$0x1]
    %v849 = vsel %vm723, %v844, 0.0
    %v850 = vrot.slane %v849, 4
    %v851 = vadd.f32 %v849, %v850
    %v852 = vrot.slane %v851, 2
    %v853 = vadd.f32 %v851, %v852
    %v854 = vrot.slane %v853, 1
    %v855 = vadd.f32 %v853, %v854
    %v856 = vmul.f32 %v844, %v844
    %v857 = vsel %vm723, %v856, 0.0
    %v858 = vrot.slane %v857, 4
    %v859 = vadd.f32 %v857, %v858
    %v860 = vrot.slane %v859, 2
    %v861 = vadd.f32 %v859, %v860
    %v862 = vrot.slane %v861, 1
    %v863 = vadd.f32 %v861, %v862
    %v864 = vmul.f32 %v855, 0.25
    %v865 = vmul.f32 %v863, 0.25
    %v866 = vmul.f32 %v864, %v864
    %v867 = vsub.f32 %v865, %v866
    %v868 = vmax.f32 %v867, 0.0
    %v869 = vadd.f32 %v868, 1e-05
    %v870 = vrsqrt.pop %v869
    %v871 = vmul.f32 %v847, %v870
    %v872 = vlaneseq
    %v873 = vshrl.u32 %v872, 7
    %v874 = vsub.s32 0, %v873
    %v875 = vrot.slane %v871, %v874
    %v876 = vmul.f32 %v844, %v875
    %v877 = vmul.f32 %v864, %v871
    %v878 = vsub.f32 %v848, %v877
    %v879 = vlaneseq
    %v880 = vshrl.u32 %v879, 7
    %v881 = vsub.s32 0, %v880
    %v882 = vrot.slane %v878, %v881
    %v883 = vadd.f32 %v876, %v882
    %v884 = vtanh.pop %v883
    %v885 = vld [vmem:[%s5 + $0x90] sm:$0xff]
    %v886 = vld [vmem:[%s5 + $0x98] sm:$0xff]
    %v887 = vld [vmem:[%s5 + $0xa0] sm:$0xff]
    %v888 = vld [vmem:[%s5 + $0xa8] sm:$0xff]
    %v889 = vld [vmem:[%s5 + $0xb0] sm:$0xff]
    %v890 = vld [vmem:[%s5 + $0xb8] sm:$0xff]
    %v891 = vld [vmem:[%s5 + $0xc0] sm:$0xff]
    %v892 = vld [vmem:[%s5 + $0xc8] sm:$0xff]
    %v893 = vld [vmem:[%s6 + $0x6] sm:$0x1]
    %v894 = vlaneseq
    %v895 = vshrl.u32 %v894, 7
    %v896 = vsub.s32 0, %v895
    %v897 = vrot.slane %v893, %v896
    %v899 = vsel %vm773, %v884, 0
    %901 = vmatprep.subr.mxu0 0.0
    %902 = vmatpush1.msra.mxu0 0.0
    %903 = vmatprep.subr.mxu0 0.0
    %904 = vmatpush1.msra.mxu0 0.0
    %905 = vmatprep.subr.mxu0 0.0
    %906 = vmatpush1.msra.mxu0 0.0
    %907 = vmatprep.subr.mxu0 0.0
    %908 = vmatpush1.msra.mxu0 0.0
    %909 = vmatprep.subr.mxu0 0.0
    %910 = vmatpush1.msra.mxu0 0.0
    %911 = vmatprep.subr.mxu0 0.0
    %912 = vmatpush1.msra.mxu0 0.0
    %913 = vmatprep.subr.mxu0 0.0
    %914 = vmatpush1.msra.mxu0 0.0
    %915 = vmatprep.subr.mxu0 0.0
    %916 = vmatpush1.msra.mxu0 0.0
    %917 = vmatprep.subr.mxu0 0.0
    %918 = vmatpush1.msra.mxu0 %v892
    %919 = vmatprep.subr.mxu0 0.0
    %920 = vmatpush1.msra.mxu0 %v891
    %921 = vmatprep.subr.mxu0 0.0
    %922 = vmatpush1.msra.mxu0 %v890
    %923 = vmatprep.subr.mxu0 0.0
    %924 = vmatpush1.msra.mxu0 %v889
    %925 = vmatprep.subr.mxu0 0.0
    %926 = vmatpush1.msra.mxu0 %v888
    %927 = vmatprep.subr.mxu0 0.0
    %928 = vmatpush1.msra.mxu0 %v887
    %929 = vmatprep.subr.mxu0 0.0
    %930 = vmatpush1.msra.mxu0 %v886
    %931 = vmatprep.subr.mxu0 0.0
    %932 = vmatpush1.msra.mxu0 %v885
    %933 = vmatprep.subr.mxu0 0.0
    %934 = vmatpush2.msra.mxu0 0.0
    %935 = vmatprep.subr.mxu0 0.0
    %936 = vmatpush2.msra.mxu0 0.0
    %937 = vmatprep.subr.mxu0 0.0
    %938 = vmatpush2.msra.mxu0 0.0
    %939 = vmatprep.subr.mxu0 0.0
    %940 = vmatpush2.msra.mxu0 0.0
    %941 = vmatprep.subr.mxu0 0.0
    %942 = vmatpush2.msra.mxu0 0.0
    %943 = vmatprep.subr.mxu0 0.0
    %944 = vmatpush2.msra.mxu0 0.0
    %945 = vmatprep.subr.mxu0 0.0
    %946 = vmatpush2.msra.mxu0 0.0
    %947 = vmatprep.subr.mxu0 0.0
    %948 = vmatpush2.msra.mxu0 0.0
    %949 = vmatprep.subr.mxu0 0.0
    %950 = vmatpush2.msra.mxu0 0.0
    %951 = vmatprep.subr.mxu0 0.0
    %952 = vmatpush2.msra.mxu0 0.0
    %953 = vmatprep.subr.mxu0 0.0
    %954 = vmatpush2.msra.mxu0 0.0
    %955 = vmatprep.subr.mxu0 0.0
    %956 = vmatpush2.msra.mxu0 0.0
    %957 = vmatprep.subr.mxu0 0.0
    %958 = vmatpush2.msra.mxu0 0.0
    %959 = vmatprep.subr.mxu0 0.0
    %960 = vmatpush2.msra.mxu0 0.0
    %961 = vmatprep.subr.mxu0 0.0
    %962 = vmatpush2.msra.mxu0 0.0
    %963 = vmatprep.subr.mxu0 0.0
    %964 = vmatpush2.msra.mxu0 0.0
    %965 = vmatprep.mubr.f32.mxu0 0.0
    %966 = vmatmul.mubr.f32.gmra.mxu0 %v899
    %v967 = vpop.f32.mrf.mxu0
    %v968 = vadd.f32 %v897, %v967
    %v969 = vpop.f32.mrf.mxu0
    %970 = vdwg.mxu0
    %v971 = vld [vmem:[%s6 + $0x7] sm:$0x1]
    %v972 = vld [vmem:[%s6 + $0x8] sm:$0x1]
    %vm973 = vcmask 257024
    %v974 = vsel %vm973, %v968, 0.0
    %v975 = vrot.slane %v974, 4
    %v976 = vadd.f32 %v974, %v975
    %v977 = vrot.slane %v976, 2
    %v978 = vadd.f32 %v976, %v977
    %v979 = vrot.slane %v978, 1
    %v980 = vadd.f32 %v978, %v979
    %v981 = vmul.f32 %v968, %v968
    %v982 = vsel %vm973, %v981, 0.0
    %v983 = vrot.slane %v982, 4
    %v984 = vadd.f32 %v982, %v983
    %v985 = vrot.slane %v984, 2
    %v986 = vadd.f32 %v984, %v985
    %v987 = vrot.slane %v986, 1
    %v988 = vadd.f32 %v986, %v987
    %v989 = vmul.f32 %v980, 0.25
    %v990 = vmul.f32 %v988, 0.25
    %v991 = vmul.f32 %v989, %v989
    %v992 = vsub.f32 %v990, %v991
    %v993 = vmax.f32 %v992, 0.0
    %v994 = vadd.f32 %v993, 1e-05
    %v995 = vrsqrt.pop %v994
    %v996 = vmul.f32 %v971, %v995
    %v997 = vlaneseq
    %v998 = vshrl.u32 %v997, 7
    %v999 = vsub.s32 0, %v998
    %v1000 = vrot.slane %v996, %v999
    %v1001 = vmul.f32 %v968, %v1000
    %v1002 = vmul.f32 %v989, %v996
    %v1003 = vsub.f32 %v972, %v1002
    %v1004 = vlaneseq
    %v1005 = vshrl.u32 %v1004, 7
    %v1006 = vsub.s32 0, %v1005
    %v1007 = vrot.slane %v1003, %v1006
    %v1008 = vadd.f32 %v1001, %v1007
    %1010 = vrot.lane.b32.xlu0 %v1008, 72
    %v1011 = vpop.permute.xlu0 %1010
    %v1013 = vsel %vm254, %v556, %v1011
    %vm1014 = vcmask 850944
    %v1015 = vsel %vm1014, %v1013, 0.0
    %1016 = vst [vmem:[#allocation2] sm:$0xf] %v1015
    // Predicated region
    $region30: #{tpu_custom_call.1} parent=1 // pred_check
      _
    $region31: #{tpu_custom_call.1} parent=1 // pred_check_branch
      %1018 = sbr.rel (0) target = $region33
    $region32: #{tpu_custom_call.1} parent=1 // pred_region
      %s1020 = ssub.s32 64, 64
      %1021 = vsyncadd [#allocation3], %s1020
      %s1023 = sshll.u32 [#allocation2], 4
      %s1024 = int_to_ptr.vmem [resolvable:$true] %s1023
      %1026 = dma.vmem_to_hbm [thread:$0]  %s1024, 64, %s7, [#allocation3]
    $region33: #{tpu_custom_call.1} parent=1 // pred_fallthru
      _
    // Predicated region
    $region34: #{tpu_custom_call.1} parent=1 // pred_check
      _
    $region35: #{tpu_custom_call.1} parent=1 // pred_check_branch
      %1028 = sbr.rel (0) target = $region37
    $region36: #{tpu_custom_call.1} parent=1 // pred_region
      %1029 = dma.done [#allocation3], 64
    $region37: #{tpu_custom_call.1} parent=1 // pred_fallthru
      _
    %1030 = vsyncpa [#allocation3], 1

</llo_original>
